<compile_context>
chip_gen: v7x
topology: tpu7x:2x2x1
jax: 0.10.0
libtpu: 0.0.40
codegen_flags: <defaults>
</compile_context>

<pallas_src>
import jax
import jax.numpy as jnp
from jax import lax
from jax.experimental import pallas as pl
from jax.experimental.pallas import tpu as pltpu

# Problem sizes (small, consistent with a SPADE feature map).
N, CIN, H, W = 2, 4, 16, 16
COUT = CIN
KH = KW = 3

LANES_IN = (W + 2) * CIN        # 72  : one zero-padded input row, lane-dense (w, cin)
LANES_OUT = W * COUT            # 64  : one output row, lane-dense (w, cout)
KROWS = KH + 1                  # 4   : padded rows feeding a pair of output rows
ROWS_PAIR = N * (H // 2)        # 16  : paired output rows, (n, h//2) flattened
LHS_K = KROWS * LANES_IN        # 288 : contraction dim
OUT_LANES = 2 * LANES_OUT       # 128 : lane-dense paired output row


def conv3x3_kernel(lhs_ref, t_ref, b_ref, o_ref):
    """Single MXU matmul for the whole batch.

    lhs_ref: (ROWS_PAIR, LHS_K)    pre-gathered im2col rows (4 padded h-rows each)
    t_ref:   (LHS_K, OUT_LANES)    paired-row block-Toeplitz weights
    b_ref:   (1, OUT_LANES)        bias tiled along (h-pair, w)
    o_ref:   (ROWS_PAIR, OUT_LANES) 128-lane-dense output rows
    """
    acc = jnp.dot(lhs_ref[...], t_ref[...], preferred_element_type=jnp.float32)
    o_ref[...] = (acc + b_ref[...]).astype(o_ref.dtype)


def make_conv3x3_params(w_hwio, b):
    """Build the (288, 128) paired-row block-Toeplitz matrix + bias row ONCE.

    Base mapping (same as verified previous version):
      T[kh, (w+kw)*CIN + cin, w*COUT + cout] = w_hwio[kh, kw, cin, cout]
    so padded_row[h+kh] @ T[kh] realizes the conv along W/channels for row h.
    The paired matrix embeds T twice, shifted by one padded row, so one
    contraction over 4 padded rows emits both output rows of the pair:
      T2[kr*LANES_IN + r, 0*LANES_OUT + c] = T[kr, r, c]      (kr = 0..2)
      T2[kr*LANES_IN + r, 1*LANES_OUT + c] = T[kr-1, r, c]    (kr = 1..3)
    """
    r_idx = jnp.arange(LANES_IN)                        # (72,)
    w_idx = jnp.arange(W)                               # (16,)
    j_idx = jnp.arange(KW * CIN)                        # (12,)  j = kw*CIN + cin
    onehot = (r_idx[None, None, :]
              == (w_idx[:, None, None] * CIN + j_idx[None, :, None])
              ).astype(w_hwio.dtype)                    # (W, KW*CIN, 72)
    blocks = w_hwio.reshape(KH, KW * CIN, COUT)         # (KH, 12, COUT)
    t = jnp.einsum("wjr,kjc->krwc", onehot, blocks)     # (KH, 72, W, COUT)
    t = t.reshape(KH, LANES_IN, LANES_OUT)              # (3, 72, 64)

    t2 = jnp.zeros((KROWS, LANES_IN, 2, LANES_OUT), w_hwio.dtype)
    t2 = t2.at[0:KH, :, 0, :].set(t)                    # output row 2*hp
    t2 = t2.at[1:KH + 1, :, 1, :].set(t)                # output row 2*hp + 1
    t2 = t2.reshape(LHS_K, OUT_LANES)                   # (288, 128)

    b_row = jnp.tile(b, 2 * W).reshape(1, OUT_LANES)    # (1, 128)
    return t2, b_row


def conv3x3_pallas(x_nchw, t2, b_row):
    """3x3 conv, padding=1, stride=1.  x_nchw: (N, CIN, H, W)."""
    # Wrapper-side im2col (fuses into one small XLA fusion): NCHW -> padded,
    # lane-dense rows, then 4-row sliding windows with stride 2 along h.
    x = jnp.transpose(x_nchw, (0, 2, 3, 1))                          # NHWC
    xp = jnp.pad(x, ((0, 0), (1, 1), (1, 1), (0, 0)))                # (N,H+2,W+2,CIN)
    xp = xp.reshape(N, H + 2, LANES_IN)                              # (N, 18, 72)
    # Window hp covers padded rows 2*hp .. 2*hp+3  (feeds output rows 2hp, 2hp+1).
    win = jnp.stack([xp[:, kr:kr + H:2, :] for kr in range(KROWS)], axis=2)
    lhs = win.reshape(ROWS_PAIR, LHS_K)                              # (16, 288)

    out_rows = pl.pallas_call(
        conv3x3_kernel,
        out_shape=jax.ShapeDtypeStruct((ROWS_PAIR, OUT_LANES), x_nchw.dtype),
        grid=(1,),                                                   # single step
        in_specs=[
            pl.BlockSpec((ROWS_PAIR, LHS_K), lambda i: (0, 0)),
            pl.BlockSpec((LHS_K, OUT_LANES), lambda i: (0, 0)),
            pl.BlockSpec((1, OUT_LANES), lambda i: (0, 0)),
        ],
        out_specs=pl.BlockSpec((ROWS_PAIR, OUT_LANES), lambda i: (0, 0)),
        compiler_params=pltpu.CompilerParams(
            dimension_semantics=("arbitrary",)),
    )(lhs, t2, b_row)

    # (N*H/2, 2*W*COUT): row = (n, hp), lanes = (po, w, cout) with h = 2*hp + po.
    out_nhwc = out_rows.reshape(N, H // 2, 2, W, COUT).reshape(N, H, W, COUT)
    return jnp.transpose(out_nhwc, (0, 3, 1, 2))                     # NCHW


def tuple_left_forward(x, t2, b_row):
    """TupleLeft.forward: apply wrapped module to x[0], pass x[1] through."""
    assert isinstance(x, tuple) and len(x) == 2, f"type: {type(x)}"
    r1 = conv3x3_pallas(x[0], t2, b_row)
    return (r1, x[1])


def _reference_conv(x_nchw, w_hwio, b):
    # Plain-JAX reference (NCHW, matching PyTorch Conv2d semantics).
    w_oihw = jnp.transpose(w_hwio, (3, 2, 0, 1))
    y = lax.conv_general_dilated(
        x_nchw, w_oihw, window_strides=(1, 1), padding=((1, 1), (1, 1)),
        dimension_numbers=("NCHW", "OIHW", "NCHW"))
    return y + b.reshape(1, COUT, 1, 1)


if __name__ == "__main__":
    key = jax.random.PRNGKey(0)
    k_x0, k_x1, k_w, k_b = jax.random.split(key, 4)

    # Tuple input: (feature map, conditioning map) — second element untouched.
    x0 = jax.random.normal(k_x0, (N, CIN, H, W), dtype=jnp.float32)
    x1 = jax.random.normal(k_x1, (N, 1, H, W), dtype=jnp.float32)

    # Deterministic inner-module (Conv2d 3x3) params, HWIO layout.
    w = jax.random.normal(k_w, (KH, KW, CIN, COUT), dtype=jnp.float32) * 0.1
    b = jax.random.normal(k_b, (COUT,), dtype=jnp.float32) * 0.1

    # Build Toeplitz weights / bias row once (static-weight hot-path caching).
    t2, b_row = make_conv3x3_params(w, b)
    t2, b_row = jax.block_until_ready(t2), jax.block_until_ready(b_row)

    forward = jax.jit(tuple_left_forward)
    r1, r2 = forward((x0, x1), t2, b_row)
    jax.block_until_ready(r1)
    jax.block_until_ready(r2)

    # Sanity: conv matches reference; second element is passed through unchanged.
    ref = _reference_conv(x0, w, b)
    assert jnp.allclose(r1, ref, rtol=1e-4, atol=1e-4), "conv mismatch"
    assert jnp.array_equal(r2, x1), "second tuple element must be unchanged"

    print("KERNEL_OK")
</pallas_src>

<mosaic_0001>
module attributes {stable_mosaic.version = 11 : i64} {
  func.func @conv3x3_kernel(%arg0: i32, %arg1: memref<16x288xf32, #tpu.memory_space<vmem>>, %arg2: memref<288x128xf32, #tpu.memory_space<vmem>>, %arg3: memref<1x128xf32, #tpu.memory_space<vmem>>, %arg4: memref<16x128xf32, #tpu.memory_space<vmem>>) attributes {dimension_semantics = [#tpu.dimension_semantics<arbitrary>], iteration_bounds = array<i64: 1>, scalar_prefetch = 0 : i64, scratch_operands = 0 : i64, tpu.core_type = #tpu.core_type<tc>, window_params = [{pipeline_mode = #tpu.pipeline_mode<synchronous>, transform_indices = @transform_0, window_bounds = array<i64: 16, 288>}, {pipeline_mode = #tpu.pipeline_mode<synchronous>, transform_indices = @transform_1, window_bounds = array<i64: 288, 128>}, {pipeline_mode = #tpu.pipeline_mode<synchronous>, transform_indices = @transform_2, window_bounds = array<i64: 1, 128>}, {pipeline_mode = #tpu.pipeline_mode<synchronous>, transform_indices = @transform_3, window_bounds = array<i64: 16, 128>}]} {
    %c0 = arith.constant 0 : index
    %c0_0 = arith.constant 0 : index
    %0 = vector.load %arg1[%c0, %c0_0] : memref<16x288xf32, #tpu.memory_space<vmem>>, vector<16x288xf32>
    %c0_1 = arith.constant 0 : index
    %c0_2 = arith.constant 0 : index
    %1 = vector.load %arg2[%c0_1, %c0_2] : memref<288x128xf32, #tpu.memory_space<vmem>>, vector<288x128xf32>
    %cst = arith.constant dense<0.000000e+00> : vector<16x128xf32>
    %2 = tpu.matmul %0, %1, %cst {dimension_numbers = #tpu.dot_dimension_numbers<[1], [0], [0], [1], [0, 0, 1, 1], [], []>} : vector<16x288xf32>, vector<288x128xf32>, vector<16x128xf32> -> vector<16x128xf32>
    %c0_3 = arith.constant 0 : index
    %c0_4 = arith.constant 0 : index
    %3 = vector.load %arg3[%c0_3, %c0_4] : memref<1x128xf32, #tpu.memory_space<vmem>>, vector<1x128xf32>
    %4 = vector.broadcast %3 : vector<1x128xf32> to vector<16x128xf32>
    %5 = arith.addf %2, %4 : vector<16x128xf32>
    %c0_5 = arith.constant 0 : index
    %c0_6 = arith.constant 0 : index
    %6 = vector.load %arg4[%c0_5, %c0_6] : memref<16x128xf32, #tpu.memory_space<vmem>>, vector<16x128xf32>
    tpu.vector_store %arg4[%c0_5, %c0_6], %5 {strides = array<i32>} : memref<16x128xf32, #tpu.memory_space<vmem>>, vector<16x128xf32>,
    return
  }
  func.func @transform_0(%arg0: i32) -> (i32, i32) {
    %c0_i32 = arith.constant 0 : i32
    %c0_i32_0 = arith.constant 0 : i32
    %c0_i32_1 = arith.constant 0 : i32
    return %c0_i32, %c0_i32_0 : i32, i32
  }
  func.func @transform_1(%arg0: i32) -> (i32, i32) {
    %c0_i32 = arith.constant 0 : i32
    %c0_i32_0 = arith.constant 0 : i32
    %c0_i32_1 = arith.constant 0 : i32
    return %c0_i32, %c0_i32_0 : i32, i32
  }
  func.func @transform_2(%arg0: i32) -> (i32, i32) {
    %c0_i32 = arith.constant 0 : i32
    %c0_i32_0 = arith.constant 0 : i32
    %c0_i32_1 = arith.constant 0 : i32
    return %c0_i32, %c0_i32_0 : i32, i32
  }
  func.func @transform_3(%arg0: i32) -> (i32, i32) {
    %c0_i32 = arith.constant 0 : i32
    %c0_i32_0 = arith.constant 0 : i32
    %c0_i32_1 = arith.constant 0 : i32
    return %c0_i32, %c0_i32_0 : i32, i32
  }
}

</mosaic_0001>

<llo_original>
// kernel: tuple_left_forward.1
$region0: #{tuple_left_forward.1}
  #allocation0 [shape = 'u32[]', space=smem, size = 0x4, offset = 0x4, fixed_abs, tag = 'smem constant byte address 0x4 - core index']
  #allocation1 [shape = 'u32[144,128]{1,0:T(1,128)}', space=vmem, size = 0x12000, scoped, tag = 'internal scratch']
  %s0 = inlined_call_operand.vmem [shape: f32[16,288], index: 0, kind: input, shape index: {}]
  %s1 = inlined_call_operand.vmem [shape: f32[288,128], index: 1, kind: input, shape index: {}]
  %s2 = inlined_call_operand.vmem [shape: f32[1,128], index: 2, kind: input, shape index: {}]
  %s3 = inlined_call_operand.vmem [shape: f32[16,128], index: 3, kind: output, shape index: {}]
  %s4 = sld [smem:[#allocation0]]
  $region22: #{tuple_left_forward.1} parent=0
    _
  %s6 = ssub.s32 1, %s4
  %s7 = scalar_select 0, %s6, %s4
  // Predicated region
  $region2: #{tuple_left_forward.1} parent=0 // pred_check
    _
  $region3: #{tuple_left_forward.1} parent=0 // pred_check_branch
    %9 = sbr.rel (0) target = $region5
  $region4: #{tuple_left_forward.1} parent=0 // pred_region
    _
  $region5: #{tuple_left_forward.1} parent=0 // pred_fallthru
    _
  // Predicated region
  $region6: #{tuple_left_forward.1} parent=0 // pred_check
    _
  $region7: #{tuple_left_forward.1} parent=0 // pred_check_branch
    %11 = sbr.rel (0) target = $region9
  $region8: #{tuple_left_forward.1} parent=0 // pred_region
    _
  $region9: #{tuple_left_forward.1} parent=0 // pred_fallthru
    _
  // Predicated region
  $region10: #{tuple_left_forward.1} parent=0 // pred_check
    _
  $region11: #{tuple_left_forward.1} parent=0 // pred_check_branch
    %13 = sbr.rel (0) target = $region13
  $region12: #{tuple_left_forward.1} parent=0 // pred_region
    _
  $region13: #{tuple_left_forward.1} parent=0 // pred_fallthru
    _
  %v14 = vld [vmem:[%s0] sm:$0xff]
  %v15 = vld [vmem:[%s0 + $0x8] sm:$0xff]
  %v16 = vld [vmem:[%s0 + $0x10] sm:$0xff]
  %v17 = vld [vmem:[%s0 + $0x18] sm:$0xff]
  %v18 = vld [vmem:[%s0 + $0x20] sm:$0xff]
  %v19 = vld [vmem:[%s0 + $0x28] sm:$0xff]
  %v20 = vld [vmem:[%s1] sm:$0xff]
  %v21 = vld [vmem:[%s1 + $0x8] sm:$0xff]
  %v22 = vld [vmem:[%s1 + $0x10] sm:$0xff]
  %v23 = vld [vmem:[%s1 + $0x18] sm:$0xff]
  %v24 = vld [vmem:[%s1 + $0x20] sm:$0xff]
  %v25 = vld [vmem:[%s1 + $0x28] sm:$0xff]
  %v26 = vld [vmem:[%s1 + $0x30] sm:$0xff]
  %v27 = vld [vmem:[%s1 + $0x38] sm:$0xff]
  %v28 = vld [vmem:[%s1 + $0x40] sm:$0xff]
  %v29 = vld [vmem:[%s1 + $0x48] sm:$0xff]
  %v30 = vld [vmem:[%s1 + $0x50] sm:$0xff]
  %v31 = vld [vmem:[%s1 + $0x58] sm:$0xff]
  %v32 = vld [vmem:[%s1 + $0x60] sm:$0xff]
  %v33 = vld [vmem:[%s1 + $0x68] sm:$0xff]
  %v34 = vld [vmem:[%s1 + $0x70] sm:$0xff]
  %v35 = vld [vmem:[%s1 + $0x78] sm:$0xff]
  %v36 = vld [vmem:[%s1 + $0x80] sm:$0xff]
  %v37 = vld [vmem:[%s1 + $0x88] sm:$0xff]
  %v38 = vld [vmem:[%s1 + $0x90] sm:$0xff]
  %v39 = vld [vmem:[%s1 + $0x98] sm:$0xff]
  %v40 = vld [vmem:[%s1 + $0xa0] sm:$0xff]
  %v41 = vld [vmem:[%s1 + $0xa8] sm:$0xff]
  %v42 = vld [vmem:[%s1 + $0xb0] sm:$0xff]
  %v43 = vld [vmem:[%s1 + $0xb8] sm:$0xff]
  %v44 = vld [vmem:[%s1 + $0xc0] sm:$0xff]
  %v45 = vld [vmem:[%s1 + $0xc8] sm:$0xff]
  %v46 = vld [vmem:[%s1 + $0xd0] sm:$0xff]
  %v47 = vld [vmem:[%s1 + $0xd8] sm:$0xff]
  %v48 = vld [vmem:[%s1 + $0xe0] sm:$0xff]
  %v49 = vld [vmem:[%s1 + $0xe8] sm:$0xff]
  %v50 = vld [vmem:[%s1 + $0xf0] sm:$0xff]
  %v51 = vld [vmem:[%s1 + $0xf8] sm:$0xff]
  %v52 = vld [vmem:[%s1 + $0x100] sm:$0xff]
  %v53 = vld [vmem:[%s1 + $0x108] sm:$0xff]
  %v54 = vld [vmem:[%s1 + $0x110] sm:$0xff]
  %v55 = vld [vmem:[%s1 + $0x118] sm:$0xff]
  %v56 = vld [vmem:[%s2] sm:$0x1]
  %v58 = vlaneseq
  %v59 = vshrl.u32 %v58, 7
  %v60 = vsub.s32 0, %v59
  %v61 = vrot.slane %v56, %v60
  %vm63 = vcmask 261120
  %v65 = vsel %vm63, %v16, 0
  %v68 = vsel %vm63, %v19, 0
  %70 = vmatprep.subr.mxu0 0.0
  %71 = vmatpush1.msra.mxu0 %v20
  %72 = vmatprep.subr.mxu0 0.0
  %73 = vmatpush1.msra.mxu0 %v21
  %74 = vmatprep.subr.mxu0 0.0
  %75 = vmatpush1.msra.mxu0 %v22
  %76 = vmatprep.subr.mxu0 0.0
  %77 = vmatpush1.msra.mxu0 %v23
  %78 = vmatprep.subr.mxu0 0.0
  %79 = vmatpush1.msra.mxu0 %v24
  %80 = vmatprep.subr.mxu0 0.0
  %81 = vmatpush1.msra.mxu0 %v25
  %82 = vmatprep.subr.mxu0 0.0
  %83 = vmatpush1.msra.mxu0 %v26
  %84 = vmatprep.subr.mxu0 0.0
  %85 = vmatpush1.msra.mxu0 %v27
  %86 = vmatprep.subr.mxu0 0.0
  %87 = vmatpush1.msra.mxu0 %v28
  %88 = vmatprep.subr.mxu0 0.0
  %89 = vmatpush1.msra.mxu0 %v29
  %90 = vmatprep.subr.mxu0 0.0
  %91 = vmatpush1.msra.mxu0 %v30
  %92 = vmatprep.subr.mxu0 0.0
  %93 = vmatpush1.msra.mxu0 %v31
  %94 = vmatprep.subr.mxu0 0.0
  %95 = vmatpush1.msra.mxu0 %v32
  %96 = vmatprep.subr.mxu0 0.0
  %97 = vmatpush1.msra.mxu0 %v33
  %98 = vmatprep.subr.mxu0 0.0
  %99 = vmatpush1.msra.mxu0 %v34
  %100 = vmatprep.subr.mxu0 0.0
  %101 = vmatpush1.msra.mxu0 %v35
  %102 = vmatprep.subr.mxu0 0.0
  %103 = vmatpush1.msra.mxu0 %v36
  %104 = vmatprep.subr.mxu0 0.0
  %105 = vmatpush1.msra.mxu0 %v37
  %106 = vmatprep.subr.mxu0 0.0
  %107 = vmatpush1.msra.mxu0 %v38
  %108 = vmatprep.subr.mxu0 0.0
  %109 = vmatpush1.msra.mxu0 %v39
  %110 = vmatprep.subr.mxu0 0.0
  %111 = vmatpush1.msra.mxu0 %v40
  %112 = vmatprep.subr.mxu0 0.0
  %113 = vmatpush1.msra.mxu0 %v41
  %114 = vmatprep.subr.mxu0 0.0
  %115 = vmatpush1.msra.mxu0 %v42
  %116 = vmatprep.subr.mxu0 0.0
  %117 = vmatpush1.msra.mxu0 %v43
  %118 = vmatprep.subr.mxu0 0.0
  %119 = vmatpush1.msra.mxu0 %v44
  %120 = vmatprep.subr.mxu0 0.0
  %121 = vmatpush1.msra.mxu0 %v45
  %122 = vmatprep.subr.mxu0 0.0
  %123 = vmatpush1.msra.mxu0 %v46
  %124 = vmatprep.subr.mxu0 0.0
  %125 = vmatpush1.msra.mxu0 %v47
  %126 = vmatprep.subr.mxu0 0.0
  %127 = vmatpush1.msra.mxu0 %v48
  %128 = vmatprep.subr.mxu0 0.0
  %129 = vmatpush1.msra.mxu0 %v49
  %130 = vmatprep.subr.mxu0 0.0
  %131 = vmatpush1.msra.mxu0 %v50
  %132 = vmatprep.subr.mxu0 0.0
  %133 = vmatpush1.msra.mxu0 %v51
  %134 = vmatprep.mubr.f32.mxu0 %v15
  %135 = vmatmul.mubr.f32.gmra.mrb[0].mxu0 %v14
  %v136 = vpop.f32.mrb[0].mxu0
  %v137 = vadd.f32 %v61, %v136
  %v138 = vpop.f32.mrb[0].mxu0
  %139 = vmatprep.mubr.f32.mxu0 %v18
  %140 = vmatmul.mubr.f32.gmra.mrb[0].mxu0 %v17
  %v141 = vpop.f32.mrb[0].mxu0
  %v142 = vadd.f32 %v61, %v141
  %v143 = vpop.f32.mrb[0].mxu0
  %144 = vdwg.mxu0
  %145 = vmatprep.subr.mxu0 0.0
  %146 = vmatpush1.msra.mxu0 %v52
  %147 = vmatprep.subr.mxu0 0.0
  %148 = vmatpush1.msra.mxu0 %v53
  %149 = vmatprep.subr.mxu0 0.0
  %150 = vmatpush1.msra.mxu0 %v54
  %151 = vmatprep.subr.mxu0 0.0
  %152 = vmatpush1.msra.mxu0 %v55
  %153 = vmatprep.subr.mxu0 0.0
  %154 = vmatpush1.msra.mxu0 0.0
  %155 = vmatprep.subr.mxu0 0.0
  %156 = vmatpush1.msra.mxu0 0.0
  %157 = vmatprep.subr.mxu0 0.0
  %158 = vmatpush1.msra.mxu0 0.0
  %159 = vmatprep.subr.mxu0 0.0
  %160 = vmatpush1.msra.mxu0 0.0
  %161 = vmatprep.subr.mxu0 0.0
  %162 = vmatpush1.msra.mxu0 0.0
  %163 = vmatprep.subr.mxu0 0.0
  %164 = vmatpush1.msra.mxu0 0.0
  %165 = vmatprep.subr.mxu0 0.0
  %166 = vmatpush1.msra.mxu0 0.0
  %167 = vmatprep.subr.mxu0 0.0
  %168 = vmatpush1.msra.mxu0 0.0
  %169 = vmatprep.subr.mxu0 0.0
  %170 = vmatpush1.msra.mxu0 0.0
  %171 = vmatprep.subr.mxu0 0.0
  %172 = vmatpush1.msra.mxu0 0.0
  %173 = vmatprep.subr.mxu0 0.0
  %174 = vmatpush1.msra.mxu0 0.0
  %175 = vmatprep.subr.mxu0 0.0
  %176 = vmatpush1.msra.mxu0 0.0
  %177 = vmatprep.subr.mxu0 0.0
  %178 = vmatpush1.msra.mxu0 0.0
  %179 = vmatprep.subr.mxu0 0.0
  %180 = vmatpush1.msra.mxu0 0.0
  %181 = vmatprep.subr.mxu0 0.0
  %182 = vmatpush1.msra.mxu0 0.0
  %183 = vmatprep.subr.mxu0 0.0
  %184 = vmatpush1.msra.mxu0 0.0
  %185 = vmatprep.subr.mxu0 0.0
  %186 = vmatpush1.msra.mxu0 0.0
  %187 = vmatprep.subr.mxu0 0.0
  %188 = vmatpush1.msra.mxu0 0.0
  %189 = vmatprep.subr.mxu0 0.0
  %190 = vmatpush1.msra.mxu0 0.0
  %191 = vmatprep.subr.mxu0 0.0
  %192 = vmatpush1.msra.mxu0 0.0
  %193 = vmatprep.subr.mxu0 0.0
  %194 = vmatpush1.msra.mxu0 0.0
  %195 = vmatprep.subr.mxu0 0.0
  %196 = vmatpush1.msra.mxu0 0.0
  %197 = vmatprep.subr.mxu0 0.0
  %198 = vmatpush1.msra.mxu0 0.0
  %199 = vmatprep.subr.mxu0 0.0
  %200 = vmatpush1.msra.mxu0 0.0
  %201 = vmatprep.subr.mxu0 0.0
  %202 = vmatpush1.msra.mxu0 0.0
  %203 = vmatprep.subr.mxu0 0.0
  %204 = vmatpush1.msra.mxu0 0.0
  %205 = vmatprep.subr.mxu0 0.0
  %206 = vmatpush1.msra.mxu0 0.0
  %207 = vmatprep.subr.mxu0 0.0
  %208 = vmatpush1.msra.mxu0 0.0
  %209 = vmatprep.mubr.f32.mxu0 0.0
  %210 = vmatmul.mubr.f32.gmra.mrb[0].mxu0 %v65
  %v211 = vpop.f32.mrb[0].mxu0
  %v212 = vadd.f32 %v137, %v211
  %v213 = vpop.f32.mrb[0].mxu0
  %214 = vmatprep.mubr.f32.mxu0 0.0
  %215 = vmatmul.mubr.f32.gmra.mrb[0].mxu0 %v68
  %v216 = vpop.f32.mrb[0].mxu0
  %v217 = vadd.f32 %v142, %v216
  %v218 = vpop.f32.mrb[0].mxu0
  %219 = vdwg.mxu0
  %220 = vst [vmem:[%s3] sm:$0xff] %v212
  %221 = vst [vmem:[%s3 + $0x8] sm:$0xff] %v217
  // Predicated region
  $region14: #{tuple_left_forward.1} parent=0 // pred_check
    _
  $region15: #{tuple_left_forward.1} parent=0 // pred_check_branch
    %223 = sbr.rel (0) target = $region17
  $region16: #{tuple_left_forward.1} parent=0 // pred_region
    _
  $region17: #{tuple_left_forward.1} parent=0 // pred_fallthru
    _
  // Predicated region
  $region18: #{tuple_left_forward.1} parent=0 // pred_check
    _
  $region19: #{tuple_left_forward.1} parent=0 // pred_check_branch
    %225 = sbr.rel (0) target = $region21
  $region20: #{tuple_left_forward.1} parent=0 // pred_region
    _
  $region21: #{tuple_left_forward.1} parent=0 // pred_fallthru
    _

</llo_original>
